<compile_context>
chip_gen: v7x
topology: tpu7x:2x2x1
jax: 0.10.0
libtpu: 0.0.40
codegen_flags: <defaults>
</compile_context>

<pallas_src>
import jax
import jax.numpy as jnp
from jax import lax
from jax.experimental import pallas as pl
from jax.experimental.pallas import tpu as pltpu


def lstm_regression_kernel(x2d_ref, wih_ref, whh_ref, packed_ref, out_ref, xw_sc):
    """x2d_ref   : (S*BP, I) bf16 -- x, batch-padded to BP rows/step, flattened.
       wih_ref   : (I, 4H) bf16   (W_ih^T)
       whh_ref   : (H, 4H) bf16   (W_hh^T)
       packed_ref: (2+O, 4H) f32  -- row 0: b_ih+b_hh; rows 1:1+O: W_lin (cols :H);
                                     row 1+O: b_lin (cols :O).
       out_ref   : (B, O) f32
       xw_sc     : (S*BP, 4H) f32 scratch: x @ W_ih^T + b for all timesteps."""
    B, O = out_ref.shape
    BP = ((B + 7) // 8) * 8                 # sublane-aligned per-step batch block
    SB, _ = x2d_ref.shape
    S = SB // BP
    H = whh_ref.shape[0]

    # Unpack the small packed operands (static slices; zero runtime cost).
    b_row = packed_ref[0:1, :]              # (1, 4H) folded LSTM bias
    wl = packed_ref[1:1 + O, 0:H]           # (O, H)  final Linear weight
    bl = packed_ref[1 + O:2 + O, 0:O]       # (1, O)  final Linear bias

    # ---- 1) Batched input projection for the whole sequence (one MXU matmul). ----
    xw_sc[...] = (jnp.dot(x2d_ref[...], wih_ref[...],
                          preferred_element_type=jnp.float32)
                  + b_row)

    whh = whh_ref[...]                      # (H, 4H) bf16, hoisted out of the loop

    # ---- 2) Serial recurrence: one MXU contraction per timestep. ----
    def step(t, carry):
        h_prev, c_prev = carry              # f32 (BP, H)
        start = pl.multiple_of(t * BP, 8)   # tile-aligned slab read
        xw_t = xw_sc[pl.ds(start, BP), :]   # (BP, 4H) f32
        gates = xw_t + jnp.dot(h_prev.astype(jnp.bfloat16), whh,
                               preferred_element_type=jnp.float32)
        # Full-vreg nonlinearities (2 EUP pushes), then slice the gate blocks.
        sig = jax.nn.sigmoid(gates)         # covers i / f / o lanes
        tnh = jnp.tanh(gates)               # covers g lanes
        i_g = sig[:, 0 * H:1 * H]
        f_g = sig[:, 1 * H:2 * H]
        g_g = tnh[:, 2 * H:3 * H]
        o_g = sig[:, 3 * H:4 * H]
        c_new = f_g * c_prev + i_g * g_g
        h_new = o_g * jnp.tanh(c_new)       # 3rd EUP push
        return h_new, c_new

    h0 = jnp.zeros((BP, H), jnp.float32)
    c0 = jnp.zeros((BP, H), jnp.float32)
    unroll = True if S <= 8 else 8          # cap unroll for long sequences
    h_fin, _ = lax.fori_loop(0, S, step, (h0, c0), unroll=unroll)

    # ---- 3) Final linear layer on h_T (real batch rows only). ----
    h_b = h_fin[:B, :]                      # drop padded rows (one-time)
    if O == 1:
        # VPU broadcast-multiply + lane reduction (avoid a 1-lane-wide MXU push).
        out = jnp.sum(h_b * wl, axis=-1, keepdims=True) + bl
    else:
        out = lax.dot_general(h_b, wl, (((1,), (1,)), ((), ())),
                              preferred_element_type=jnp.float32) + bl
    out_ref[...] = out.astype(out_ref.dtype)


def lstm_regression(x, w_ih, w_hh, b_ih, b_hh, w_lin, b_lin):
    """x: (S, B, I); w_ih: (4H, I); w_hh: (4H, H); b_*: (4H,);
       w_lin: (O, H); b_lin: (O,).  Returns (B, O) = linear(h_T)."""
    S, B, I = x.shape
    fourH, H = w_hh.shape
    O = w_lin.shape[0]
    assert O <= fourH, "packed-operand layout assumes output_size <= 4*hidden"
    BP = ((B + 7) // 8) * 8                 # pad batch to the f32 sublane tile

    # Layout plumbing (outside the kernel): transpose weights for row-major MXU
    # contractions, cast MXU operands to bf16, pad the batch per timestep to BP
    # rows, and pack the three tiny f32 operands into one array.
    x_pad = jnp.zeros((S, BP, I), jnp.bfloat16).at[:, :B, :].set(
        x.astype(jnp.bfloat16))
    x2d = x_pad.reshape(S * BP, I)                               # (S*BP, I) bf16
    wih_t = jnp.transpose(w_ih).astype(jnp.bfloat16)             # (I, 4H)
    whh_t = jnp.transpose(w_hh).astype(jnp.bfloat16)             # (H, 4H)

    packed = jnp.zeros((2 + O, fourH), jnp.float32)
    packed = packed.at[0, :].set((b_ih + b_hh).astype(jnp.float32))
    packed = packed.at[1:1 + O, :H].set(w_lin.astype(jnp.float32))
    packed = packed.at[1 + O, :O].set(b_lin.astype(jnp.float32))

    vspec = pl.BlockSpec(memory_space=pltpu.MemorySpace.VMEM)    # whole array in VMEM

    return pl.pallas_call(
        lstm_regression_kernel,
        out_shape=jax.ShapeDtypeStruct((B, O), jnp.float32),
        in_specs=[vspec] * 4,
        out_specs=vspec,
        scratch_shapes=[pltpu.VMEM((S * BP, fourH), jnp.float32)],  # gate slab
    )(x2d, wih_t, whh_t, packed)


def lstm_regression_ref(x, w_ih, w_hh, b_ih, b_hh, w_lin, b_lin):
    """Plain-JAX f32 reference matching PyTorch nn.LSTM + nn.Linear semantics."""
    S, B, I = x.shape
    H = w_hh.shape[1]
    h = jnp.zeros((B, H), jnp.float32)
    c = jnp.zeros((B, H), jnp.float32)
    for t in range(S):
        gates = x[t] @ w_ih.T + h @ w_hh.T + b_ih + b_hh
        i_g = jax.nn.sigmoid(gates[:, 0 * H:1 * H])
        f_g = jax.nn.sigmoid(gates[:, 1 * H:2 * H])
        g_g = jnp.tanh(gates[:, 2 * H:3 * H])
        o_g = jax.nn.sigmoid(gates[:, 3 * H:4 * H])
        c = f_g * c + i_g * g_g
        h = o_g * jnp.tanh(c)
    return h @ w_lin.T + b_lin


if __name__ == "__main__":
    # Small deterministic setup: seq=8, batch=4, input_size=16, hidden=32, output=1
    S, B, I, H, O = 8, 4, 16, 32, 1
    key = jax.random.PRNGKey(0)
    ks = jax.random.split(key, 7)
    bound = 1.0 / jnp.sqrt(H)

    x = jax.random.normal(ks[0], (S, B, I), jnp.float32)
    w_ih = jax.random.uniform(ks[1], (4 * H, I), jnp.float32, -bound, bound)
    w_hh = jax.random.uniform(ks[2], (4 * H, H), jnp.float32, -bound, bound)
    b_ih = jax.random.uniform(ks[3], (4 * H,), jnp.float32, -bound, bound)
    b_hh = jax.random.uniform(ks[4], (4 * H,), jnp.float32, -bound, bound)
    w_lin = jax.random.uniform(ks[5], (O, H), jnp.float32, -bound, bound)
    b_lin = jax.random.uniform(ks[6], (O,), jnp.float32, -bound, bound)

    out = lstm_regression(x, w_ih, w_hh, b_ih, b_hh, w_lin, b_lin)
    out = jax.block_until_ready(out)

    ref = lstm_regression_ref(x, w_ih, w_hh, b_ih, b_hh, w_lin, b_lin)
    assert out.shape == (B, O), out.shape
    # bf16 MXU operands (x, W_ih, W_hh, h) with f32 accumulation and f32 recurrent
    # state -> compare against the pure-f32 reference with a bf16-level tolerance.
    assert jnp.allclose(out, ref, atol=2e-2, rtol=2e-2), (out, ref)

    print("KERNEL_OK")
</pallas_src>

<mosaic_0001>
module attributes {stable_mosaic.version = 11 : i64} {
  func.func @lstm_regression_kernel(%arg0: memref<64x16xbf16, #tpu.memory_space<vmem>>, %arg1: memref<16x128xbf16, #tpu.memory_space<vmem>>, %arg2: memref<32x128xbf16, #tpu.memory_space<vmem>>, %arg3: memref<3x128xf32, #tpu.memory_space<vmem>>, %arg4: memref<4x1xf32, #tpu.memory_space<vmem>>, %arg5: memref<64x128xf32, #tpu.memory_space<vmem>>) attributes {dimension_semantics = [], scalar_prefetch = 0 : i64, scratch_operands = 1 : i64, tpu.core_type = #tpu.core_type<tc>} {
    %c0 = arith.constant 0 : index
    %c0_0 = arith.constant 0 : index
    %0 = vector.load %arg3[%c0, %c0_0] : memref<3x128xf32, #tpu.memory_space<vmem>>, vector<1x128xf32>
    %c1 = arith.constant 1 : index
    %c0_1 = arith.constant 0 : index
    %1 = vector.load %arg3[%c1, %c0_1] : memref<3x128xf32, #tpu.memory_space<vmem>>, vector<1x32xf32>
    %c2 = arith.constant 2 : index
    %c0_2 = arith.constant 0 : index
    %2 = vector.load %arg3[%c2, %c0_2] : memref<3x128xf32, #tpu.memory_space<vmem>>, vector<1x1xf32>
    %c0_3 = arith.constant 0 : index
    %c0_4 = arith.constant 0 : index
    %3 = vector.load %arg0[%c0_3, %c0_4] : memref<64x16xbf16, #tpu.memory_space<vmem>>, vector<64x16xbf16>
    %c0_5 = arith.constant 0 : index
    %c0_6 = arith.constant 0 : index
    %4 = vector.load %arg1[%c0_5, %c0_6] : memref<16x128xbf16, #tpu.memory_space<vmem>>, vector<16x128xbf16>
    %cst = arith.constant dense<0.000000e+00> : vector<64x128xf32>
    %5 = tpu.matmul %3, %4, %cst {dimension_numbers = #tpu.dot_dimension_numbers<[1], [0], [0], [1], [0, 0, 1, 1], [], []>} : vector<64x16xbf16>, vector<16x128xbf16>, vector<64x128xf32> -> vector<64x128xf32>
    %6 = vector.broadcast %0 : vector<1x128xf32> to vector<64x128xf32>
    %7 = arith.addf %5, %6 : vector<64x128xf32>
    %c0_7 = arith.constant 0 : index
    %c0_8 = arith.constant 0 : index
    %8 = vector.load %arg5[%c0_7, %c0_8] : memref<64x128xf32, #tpu.memory_space<vmem>>, vector<64x128xf32>
    tpu.vector_store %arg5[%c0_7, %c0_8], %7 {strides = array<i32>} : memref<64x128xf32, #tpu.memory_space<vmem>>, vector<64x128xf32>,
    %c0_9 = arith.constant 0 : index
    %c0_10 = arith.constant 0 : index
    %9 = vector.load %arg2[%c0_9, %c0_10] : memref<32x128xbf16, #tpu.memory_space<vmem>>, vector<32x128xbf16>
    %cst_11 = arith.constant 0.000000e+00 : f32
    %10 = vector.broadcast %cst_11 : f32 to vector<8x32xf32>
    %cst_12 = arith.constant 0.000000e+00 : f32
    %11 = vector.broadcast %cst_12 : f32 to vector<8x32xf32>
    %c0_i32 = arith.constant 0 : i32
    %c8_i32 = arith.constant 8 : i32
    %12 = arith.muli %c0_i32, %c8_i32 : i32
    %13 = tpu.assume_multiple %12, 8 : i32
    %14 = arith.index_cast %13 : i32 to index
    %c0_13 = arith.constant 0 : index
    %15 = vector.load %arg5[%14, %c0_13] : memref<64x128xf32, #tpu.memory_space<vmem>>, vector<8x128xf32>
    %16 = arith.truncf %10 : vector<8x32xf32> to vector<8x32xbf16>
    %cst_14 = arith.constant dense<0.000000e+00> : vector<8x128xf32>
    %17 = tpu.matmul %16, %9, %cst_14 {dimension_numbers = #tpu.dot_dimension_numbers<[1], [0], [0], [1], [0, 0, 1, 1], [], []>} : vector<8x32xbf16>, vector<32x128xbf16>, vector<8x128xf32> -> vector<8x128xf32>
    %18 = arith.addf %15, %17 : vector<8x128xf32>
    %19 = arith.negf %18 : vector<8x128xf32>
    %20 = math.exp %19 : vector<8x128xf32>
    %cst_15 = arith.constant 1.000000e+00 : f32
    %21 = vector.broadcast %cst_15 : f32 to vector<8x128xf32>
    %22 = arith.addf %21, %20 : vector<8x128xf32>
    %23 = arith.divf %21, %22 : vector<8x128xf32>
    %24 = math.tanh %18 : vector<8x128xf32>
    %25 = vector.extract_strided_slice %23 {offsets = [0, 0], sizes = [8, 32], strides = [1, 1]} : vector<8x128xf32> to vector<8x32xf32>
    %26 = vector.extract_strided_slice %23 {offsets = [0, 32], sizes = [8, 32], strides = [1, 1]} : vector<8x128xf32> to vector<8x32xf32>
    %27 = vector.extract_strided_slice %24 {offsets = [0, 64], sizes = [8, 32], strides = [1, 1]} : vector<8x128xf32> to vector<8x32xf32>
    %28 = vector.extract_strided_slice %23 {offsets = [0, 96], sizes = [8, 32], strides = [1, 1]} : vector<8x128xf32> to vector<8x32xf32>
    %29 = arith.mulf %26, %11 : vector<8x32xf32>
    %30 = arith.mulf %25, %27 : vector<8x32xf32>
    %31 = arith.addf %29, %30 : vector<8x32xf32>
    %32 = math.tanh %31 : vector<8x32xf32>
    %33 = arith.mulf %28, %32 : vector<8x32xf32>
    %c1_i32 = arith.constant 1 : i32
    %c8_i32_16 = arith.constant 8 : i32
    %34 = arith.muli %c1_i32, %c8_i32_16 : i32
    %35 = tpu.assume_multiple %34, 8 : i32
    %36 = arith.index_cast %35 : i32 to index
    %c0_17 = arith.constant 0 : index
    %37 = vector.load %arg5[%36, %c0_17] : memref<64x128xf32, #tpu.memory_space<vmem>>, vector<8x128xf32>
    %38 = arith.truncf %33 : vector<8x32xf32> to vector<8x32xbf16>
    %cst_18 = arith.constant dense<0.000000e+00> : vector<8x128xf32>
    %39 = tpu.matmul %38, %9, %cst_18 {dimension_numbers = #tpu.dot_dimension_numbers<[1], [0], [0], [1], [0, 0, 1, 1], [], []>} : vector<8x32xbf16>, vector<32x128xbf16>, vector<8x128xf32> -> vector<8x128xf32>
    %40 = arith.addf %37, %39 : vector<8x128xf32>
    %41 = arith.negf %40 : vector<8x128xf32>
    %42 = math.exp %41 : vector<8x128xf32>
    %cst_19 = arith.constant 1.000000e+00 : f32
    %43 = vector.broadcast %cst_19 : f32 to vector<8x128xf32>
    %44 = arith.addf %43, %42 : vector<8x128xf32>
    %45 = arith.divf %43, %44 : vector<8x128xf32>
    %46 = math.tanh %40 : vector<8x128xf32>
    %47 = vector.extract_strided_slice %45 {offsets = [0, 0], sizes = [8, 32], strides = [1, 1]} : vector<8x128xf32> to vector<8x32xf32>
    %48 = vector.extract_strided_slice %45 {offsets = [0, 32], sizes = [8, 32], strides = [1, 1]} : vector<8x128xf32> to vector<8x32xf32>
    %49 = vector.extract_strided_slice %46 {offsets = [0, 64], sizes = [8, 32], strides = [1, 1]} : vector<8x128xf32> to vector<8x32xf32>
    %50 = vector.extract_strided_slice %45 {offsets = [0, 96], sizes = [8, 32], strides = [1, 1]} : vector<8x128xf32> to vector<8x32xf32>
    %51 = arith.mulf %48, %31 : vector<8x32xf32>
    %52 = arith.mulf %47, %49 : vector<8x32xf32>
    %53 = arith.addf %51, %52 : vector<8x32xf32>
    %54 = math.tanh %53 : vector<8x32xf32>
    %55 = arith.mulf %50, %54 : vector<8x32xf32>
    %c2_i32 = arith.constant 2 : i32
    %c8_i32_20 = arith.constant 8 : i32
    %56 = arith.muli %c2_i32, %c8_i32_20 : i32
    %57 = tpu.assume_multiple %56, 8 : i32
    %58 = arith.index_cast %57 : i32 to index
    %c0_21 = arith.constant 0 : index
    %59 = vector.load %arg5[%58, %c0_21] : memref<64x128xf32, #tpu.memory_space<vmem>>, vector<8x128xf32>
    %60 = arith.truncf %55 : vector<8x32xf32> to vector<8x32xbf16>
    %cst_22 = arith.constant dense<0.000000e+00> : vector<8x128xf32>
    %61 = tpu.matmul %60, %9, %cst_22 {dimension_numbers = #tpu.dot_dimension_numbers<[1], [0], [0], [1], [0, 0, 1, 1], [], []>} : vector<8x32xbf16>, vector<32x128xbf16>, vector<8x128xf32> -> vector<8x128xf32>
    %62 = arith.addf %59, %61 : vector<8x128xf32>
    %63 = arith.negf %62 : vector<8x128xf32>
    %64 = math.exp %63 : vector<8x128xf32>
    %cst_23 = arith.constant 1.000000e+00 : f32
    %65 = vector.broadcast %cst_23 : f32 to vector<8x128xf32>
    %66 = arith.addf %65, %64 : vector<8x128xf32>
    %67 = arith.divf %65, %66 : vector<8x128xf32>
    %68 = math.tanh %62 : vector<8x128xf32>
    %69 = vector.extract_strided_slice %67 {offsets = [0, 0], sizes = [8, 32], strides = [1, 1]} : vector<8x128xf32> to vector<8x32xf32>
    %70 = vector.extract_strided_slice %67 {offsets = [0, 32], sizes = [8, 32], strides = [1, 1]} : vector<8x128xf32> to vector<8x32xf32>
    %71 = vector.extract_strided_slice %68 {offsets = [0, 64], sizes = [8, 32], strides = [1, 1]} : vector<8x128xf32> to vector<8x32xf32>
    %72 = vector.extract_strided_slice %67 {offsets = [0, 96], sizes = [8, 32], strides = [1, 1]} : vector<8x128xf32> to vector<8x32xf32>
    %73 = arith.mulf %70, %53 : vector<8x32xf32>
    %74 = arith.mulf %69, %71 : vector<8x32xf32>
    %75 = arith.addf %73, %74 : vector<8x32xf32>
    %76 = math.tanh %75 : vector<8x32xf32>
    %77 = arith.mulf %72, %76 : vector<8x32xf32>
    %c3_i32 = arith.constant 3 : i32
    %c8_i32_24 = arith.constant 8 : i32
    %78 = arith.muli %c3_i32, %c8_i32_24 : i32
    %79 = tpu.assume_multiple %78, 8 : i32
    %80 = arith.index_cast %79 : i32 to index
    %c0_25 = arith.constant 0 : index
    %81 = vector.load %arg5[%80, %c0_25] : memref<64x128xf32, #tpu.memory_space<vmem>>, vector<8x128xf32>
    %82 = arith.truncf %77 : vector<8x32xf32> to vector<8x32xbf16>
    %cst_26 = arith.constant dense<0.000000e+00> : vector<8x128xf32>
    %83 = tpu.matmul %82, %9, %cst_26 {dimension_numbers = #tpu.dot_dimension_numbers<[1], [0], [0], [1], [0, 0, 1, 1], [], []>} : vector<8x32xbf16>, vector<32x128xbf16>, vector<8x128xf32> -> vector<8x128xf32>
    %84 = arith.addf %81, %83 : vector<8x128xf32>
    %85 = arith.negf %84 : vector<8x128xf32>
    %86 = math.exp %85 : vector<8x128xf32>
    %cst_27 = arith.constant 1.000000e+00 : f32
    %87 = vector.broadcast %cst_27 : f32 to vector<8x128xf32>
    %88 = arith.addf %87, %86 : vector<8x128xf32>
    %89 = arith.divf %87, %88 : vector<8x128xf32>
    %90 = math.tanh %84 : vector<8x128xf32>
    %91 = vector.extract_strided_slice %89 {offsets = [0, 0], sizes = [8, 32], strides = [1, 1]} : vector<8x128xf32> to vector<8x32xf32>
    %92 = vector.extract_strided_slice %89 {offsets = [0, 32], sizes = [8, 32], strides = [1, 1]} : vector<8x128xf32> to vector<8x32xf32>
    %93 = vector.extract_strided_slice %90 {offsets = [0, 64], sizes = [8, 32], strides = [1, 1]} : vector<8x128xf32> to vector<8x32xf32>
    %94 = vector.extract_strided_slice %89 {offsets = [0, 96], sizes = [8, 32], strides = [1, 1]} : vector<8x128xf32> to vector<8x32xf32>
    %95 = arith.mulf %92, %75 : vector<8x32xf32>
    %96 = arith.mulf %91, %93 : vector<8x32xf32>
    %97 = arith.addf %95, %96 : vector<8x32xf32>
    %98 = math.tanh %97 : vector<8x32xf32>
    %99 = arith.mulf %94, %98 : vector<8x32xf32>
    %c4_i32 = arith.constant 4 : i32
    %c8_i32_28 = arith.constant 8 : i32
    %100 = arith.muli %c4_i32, %c8_i32_28 : i32
    %101 = tpu.assume_multiple %100, 8 : i32
    %102 = arith.index_cast %101 : i32 to index
    %c0_29 = arith.constant 0 : index
    %103 = vector.load %arg5[%102, %c0_29] : memref<64x128xf32, #tpu.memory_space<vmem>>, vector<8x128xf32>
    %104 = arith.truncf %99 : vector<8x32xf32> to vector<8x32xbf16>
    %cst_30 = arith.constant dense<0.000000e+00> : vector<8x128xf32>
    %105 = tpu.matmul %104, %9, %cst_30 {dimension_numbers = #tpu.dot_dimension_numbers<[1], [0], [0], [1], [0, 0, 1, 1], [], []>} : vector<8x32xbf16>, vector<32x128xbf16>, vector<8x128xf32> -> vector<8x128xf32>
    %106 = arith.addf %103, %105 : vector<8x128xf32>
    %107 = arith.negf %106 : vector<8x128xf32>
    %108 = math.exp %107 : vector<8x128xf32>
    %cst_31 = arith.constant 1.000000e+00 : f32
    %109 = vector.broadcast %cst_31 : f32 to vector<8x128xf32>
    %110 = arith.addf %109, %108 : vector<8x128xf32>
    %111 = arith.divf %109, %110 : vector<8x128xf32>
    %112 = math.tanh %106 : vector<8x128xf32>
    %113 = vector.extract_strided_slice %111 {offsets = [0, 0], sizes = [8, 32], strides = [1, 1]} : vector<8x128xf32> to vector<8x32xf32>
    %114 = vector.extract_strided_slice %111 {offsets = [0, 32], sizes = [8, 32], strides = [1, 1]} : vector<8x128xf32> to vector<8x32xf32>
    %115 = vector.extract_strided_slice %112 {offsets = [0, 64], sizes = [8, 32], strides = [1, 1]} : vector<8x128xf32> to vector<8x32xf32>
    %116 = vector.extract_strided_slice %111 {offsets = [0, 96], sizes = [8, 32], strides = [1, 1]} : vector<8x128xf32> to vector<8x32xf32>
    %117 = arith.mulf %114, %97 : vector<8x32xf32>
    %118 = arith.mulf %113, %115 : vector<8x32xf32>
    %119 = arith.addf %117, %118 : vector<8x32xf32>
    %120 = math.tanh %119 : vector<8x32xf32>
    %121 = arith.mulf %116, %120 : vector<8x32xf32>
    %c5_i32 = arith.constant 5 : i32
    %c8_i32_32 = arith.constant 8 : i32
    %122 = arith.muli %c5_i32, %c8_i32_32 : i32
    %123 = tpu.assume_multiple %122, 8 : i32
    %124 = arith.index_cast %123 : i32 to index
    %c0_33 = arith.constant 0 : index
    %125 = vector.load %arg5[%124, %c0_33] : memref<64x128xf32, #tpu.memory_space<vmem>>, vector<8x128xf32>
    %126 = arith.truncf %121 : vector<8x32xf32> to vector<8x32xbf16>
    %cst_34 = arith.constant dense<0.000000e+00> : vector<8x128xf32>
    %127 = tpu.matmul %126, %9, %cst_34 {dimension_numbers = #tpu.dot_dimension_numbers<[1], [0], [0], [1], [0, 0, 1, 1], [], []>} : vector<8x32xbf16>, vector<32x128xbf16>, vector<8x128xf32> -> vector<8x128xf32>
    %128 = arith.addf %125, %127 : vector<8x128xf32>
    %129 = arith.negf %128 : vector<8x128xf32>
    %130 = math.exp %129 : vector<8x128xf32>
    %cst_35 = arith.constant 1.000000e+00 : f32
    %131 = vector.broadcast %cst_35 : f32 to vector<8x128xf32>
    %132 = arith.addf %131, %130 : vector<8x128xf32>
    %133 = arith.divf %131, %132 : vector<8x128xf32>
    %134 = math.tanh %128 : vector<8x128xf32>
    %135 = vector.extract_strided_slice %133 {offsets = [0, 0], sizes = [8, 32], strides = [1, 1]} : vector<8x128xf32> to vector<8x32xf32>
    %136 = vector.extract_strided_slice %133 {offsets = [0, 32], sizes = [8, 32], strides = [1, 1]} : vector<8x128xf32> to vector<8x32xf32>
    %137 = vector.extract_strided_slice %134 {offsets = [0, 64], sizes = [8, 32], strides = [1, 1]} : vector<8x128xf32> to vector<8x32xf32>
    %138 = vector.extract_strided_slice %133 {offsets = [0, 96], sizes = [8, 32], strides = [1, 1]} : vector<8x128xf32> to vector<8x32xf32>
    %139 = arith.mulf %136, %119 : vector<8x32xf32>
    %140 = arith.mulf %135, %137 : vector<8x32xf32>
    %141 = arith.addf %139, %140 : vector<8x32xf32>
    %142 = math.tanh %141 : vector<8x32xf32>
    %143 = arith.mulf %138, %142 : vector<8x32xf32>
    %c6_i32 = arith.constant 6 : i32
    %c8_i32_36 = arith.constant 8 : i32
    %144 = arith.muli %c6_i32, %c8_i32_36 : i32
    %145 = tpu.assume_multiple %144, 8 : i32
    %146 = arith.index_cast %145 : i32 to index
    %c0_37 = arith.constant 0 : index
    %147 = vector.load %arg5[%146, %c0_37] : memref<64x128xf32, #tpu.memory_space<vmem>>, vector<8x128xf32>
    %148 = arith.truncf %143 : vector<8x32xf32> to vector<8x32xbf16>
    %cst_38 = arith.constant dense<0.000000e+00> : vector<8x128xf32>
    %149 = tpu.matmul %148, %9, %cst_38 {dimension_numbers = #tpu.dot_dimension_numbers<[1], [0], [0], [1], [0, 0, 1, 1], [], []>} : vector<8x32xbf16>, vector<32x128xbf16>, vector<8x128xf32> -> vector<8x128xf32>
    %150 = arith.addf %147, %149 : vector<8x128xf32>
    %151 = arith.negf %150 : vector<8x128xf32>
    %152 = math.exp %151 : vector<8x128xf32>
    %cst_39 = arith.constant 1.000000e+00 : f32
    %153 = vector.broadcast %cst_39 : f32 to vector<8x128xf32>
    %154 = arith.addf %153, %152 : vector<8x128xf32>
    %155 = arith.divf %153, %154 : vector<8x128xf32>
    %156 = math.tanh %150 : vector<8x128xf32>
    %157 = vector.extract_strided_slice %155 {offsets = [0, 0], sizes = [8, 32], strides = [1, 1]} : vector<8x128xf32> to vector<8x32xf32>
    %158 = vector.extract_strided_slice %155 {offsets = [0, 32], sizes = [8, 32], strides = [1, 1]} : vector<8x128xf32> to vector<8x32xf32>
    %159 = vector.extract_strided_slice %156 {offsets = [0, 64], sizes = [8, 32], strides = [1, 1]} : vector<8x128xf32> to vector<8x32xf32>
    %160 = vector.extract_strided_slice %155 {offsets = [0, 96], sizes = [8, 32], strides = [1, 1]} : vector<8x128xf32> to vector<8x32xf32>
    %161 = arith.mulf %158, %141 : vector<8x32xf32>
    %162 = arith.mulf %157, %159 : vector<8x32xf32>
    %163 = arith.addf %161, %162 : vector<8x32xf32>
    %164 = math.tanh %163 : vector<8x32xf32>
    %165 = arith.mulf %160, %164 : vector<8x32xf32>
    %c7_i32 = arith.constant 7 : i32
    %c8_i32_40 = arith.constant 8 : i32
    %166 = arith.muli %c7_i32, %c8_i32_40 : i32
    %167 = tpu.assume_multiple %166, 8 : i32
    %168 = arith.index_cast %167 : i32 to index
    %c0_41 = arith.constant 0 : index
    %169 = vector.load %arg5[%168, %c0_41] : memref<64x128xf32, #tpu.memory_space<vmem>>, vector<8x128xf32>
    %170 = arith.truncf %165 : vector<8x32xf32> to vector<8x32xbf16>
    %cst_42 = arith.constant dense<0.000000e+00> : vector<8x128xf32>
    %171 = tpu.matmul %170, %9, %cst_42 {dimension_numbers = #tpu.dot_dimension_numbers<[1], [0], [0], [1], [0, 0, 1, 1], [], []>} : vector<8x32xbf16>, vector<32x128xbf16>, vector<8x128xf32> -> vector<8x128xf32>
    %172 = arith.addf %169, %171 : vector<8x128xf32>
    %173 = arith.negf %172 : vector<8x128xf32>
    %174 = math.exp %173 : vector<8x128xf32>
    %cst_43 = arith.constant 1.000000e+00 : f32
    %175 = vector.broadcast %cst_43 : f32 to vector<8x128xf32>
    %176 = arith.addf %175, %174 : vector<8x128xf32>
    %177 = arith.divf %175, %176 : vector<8x128xf32>
    %178 = math.tanh %172 : vector<8x128xf32>
    %179 = vector.extract_strided_slice %177 {offsets = [0, 0], sizes = [8, 32], strides = [1, 1]} : vector<8x128xf32> to vector<8x32xf32>
    %180 = vector.extract_strided_slice %177 {offsets = [0, 32], sizes = [8, 32], strides = [1, 1]} : vector<8x128xf32> to vector<8x32xf32>
    %181 = vector.extract_strided_slice %178 {offsets = [0, 64], sizes = [8, 32], strides = [1, 1]} : vector<8x128xf32> to vector<8x32xf32>
    %182 = vector.extract_strided_slice %177 {offsets = [0, 96], sizes = [8, 32], strides = [1, 1]} : vector<8x128xf32> to vector<8x32xf32>
    %183 = arith.mulf %180, %163 : vector<8x32xf32>
    %184 = arith.mulf %179, %181 : vector<8x32xf32>
    %185 = arith.addf %183, %184 : vector<8x32xf32>
    %186 = math.tanh %185 : vector<8x32xf32>
    %187 = arith.mulf %182, %186 : vector<8x32xf32>
    %c8_i32_44 = arith.constant 8 : i32
    %188 = vector.extract_strided_slice %187 {offsets = [0, 0], sizes = [4, 32], strides = [1, 1]} : vector<8x32xf32> to vector<4x32xf32>
    %189 = vector.broadcast %1 : vector<1x32xf32> to vector<4x32xf32>
    %190 = arith.mulf %188, %189 : vector<4x32xf32>
    %cst_45 = arith.constant dense<0.000000e+00> : vector<4xf32>
    %191 = vector.multi_reduction <add>, %190, %cst_45 [1] : vector<4x32xf32> to vector<4xf32>
    %192 = vector.shape_cast %191 : vector<4xf32> to vector<4x1xf32>
    %193 = vector.broadcast %2 : vector<1x1xf32> to vector<4x1xf32>
    %194 = arith.addf %192, %193 : vector<4x1xf32>
    %c0_46 = arith.constant 0 : index
    %c0_47 = arith.constant 0 : index
    %195 = vector.load %arg4[%c0_46, %c0_47] : memref<4x1xf32, #tpu.memory_space<vmem>>, vector<4x1xf32>
    tpu.vector_store %arg4[%c0_46, %c0_47], %194 {strides = array<i32>} : memref<4x1xf32, #tpu.memory_space<vmem>>, vector<4x1xf32>,
    return
  }
}

</mosaic_0001>

<llo_original>
// kernel: tpu_custom_call.1
$region0: #{tpu_custom_call.1}
  #allocation0 [shape = 'u32[]', space=smem, size = 0x4, offset = 0x4, fixed_abs, tag = 'smem constant byte address 0x4 - core index']
  #allocation1 [shape = 'u32[144,128]{1,0:T(1,128)}', space=vmem, size = 0x12000, scoped, tag = 'internal scratch']
  #allocation2 [shape = 'f32[64,128]{1,0:T(8,128)}', space=vmem, size = 0x8000, scoped, tag = 'scratch operand']
  %s0 = inlined_call_operand.vmem [shape: bf16[64,16], index: 0, kind: input, shape index: {}]
  %s1 = inlined_call_operand.vmem [shape: bf16[16,128], index: 1, kind: input, shape index: {}]
  %s2 = inlined_call_operand.vmem [shape: bf16[32,128], index: 2, kind: input, shape index: {}]
  %s3 = inlined_call_operand.vmem [shape: f32[3,128], index: 3, kind: input, shape index: {}]
  %s4 = inlined_call_operand.vmem [shape: f32[4,1], index: 4, kind: output, shape index: {}]
  %s5 = sld [smem:[#allocation0]]
  $region26: #{tpu_custom_call.1} parent=0
    _
  %s7 = ssub.s32 1, %s5
  %s8 = scalar_select 0, %s7, %s5
  // Predicated region
  $region2: #{tpu_custom_call.1} parent=0 // pred_check
    _
  $region3: #{tpu_custom_call.1} parent=0 // pred_check_branch
    %10 = sbr.rel (0) target = $region5
  $region4: #{tpu_custom_call.1} parent=0 // pred_region
    _
  $region5: #{tpu_custom_call.1} parent=0 // pred_fallthru
    _
  // Predicated region
  $region6: #{tpu_custom_call.1} parent=0 // pred_check
    _
  $region7: #{tpu_custom_call.1} parent=0 // pred_check_branch
    %12 = sbr.rel (0) target = $region9
  $region8: #{tpu_custom_call.1} parent=0 // pred_region
    _
  $region9: #{tpu_custom_call.1} parent=0 // pred_fallthru
    _
  // Predicated region
  $region10: #{tpu_custom_call.1} parent=0 // pred_check
    _
  $region11: #{tpu_custom_call.1} parent=0 // pred_check_branch
    %14 = sbr.rel (0) target = $region13
  $region12: #{tpu_custom_call.1} parent=0 // pred_region
    _
  $region13: #{tpu_custom_call.1} parent=0 // pred_fallthru
    _
  // Predicated region
  $region14: #{tpu_custom_call.1} parent=0 // pred_check
    _
  $region15: #{tpu_custom_call.1} parent=0 // pred_check_branch
    %16 = sbr.rel (0) target = $region17
  $region16: #{tpu_custom_call.1} parent=0 // pred_region
    _
  $region17: #{tpu_custom_call.1} parent=0 // pred_fallthru
    _
  %v18 = vld [vmem:[%s3] sm:$0x1]
  %v19 = vld [vmem:[%s3 + $0x1] sm:$0x1]
  %v20 = vld [vmem:[%s3 + $0x2] sm:$0x1]
  %v21 = vld [vmem:[%s0] sm:$0xf]
  %v22 = vld [vmem:[%s0 + $0x4] sm:$0xf]
  %v23 = vld [vmem:[%s0 + $0x8] sm:$0xf]
  %v24 = vld [vmem:[%s0 + $0xc] sm:$0xf]
  %v25 = vld [vmem:[%s0 + $0x10] sm:$0xf]
  %v26 = vld [vmem:[%s0 + $0x14] sm:$0xf]
  %v27 = vld [vmem:[%s0 + $0x18] sm:$0xf]
  %v28 = vld [vmem:[%s0 + $0x1c] sm:$0xf]
  %v29 = vld [vmem:[%s1] sm:$0xf]
  %v30 = vld [vmem:[%s1 + $0x4] sm:$0xf]
  %v31 = vlaneseq
  %v32 = vshrl.u32 %v31, 7
  %v33 = vsub.s32 0, %v32
  %v34 = vrot.slane %v18, %v33
  %v43 = vunpack.c.l.b16 %v21
  %v44 = vunpack.c.l.b16 %v22
  %v45 = vunpack.c.l.b16 %v23
  %v46 = vunpack.c.l.b16 %v24
  %v47 = vunpack.c.l.b16 %v25
  %v48 = vunpack.c.l.b16 %v26
  %v49 = vunpack.c.l.b16 %v27
  %v50 = vunpack.c.l.b16 %v28
  %v51 = vpack.c.b16 %v44, %v43
  %v52 = vpack.c.b16 %v46, %v45
  %v53 = vpack.c.b16 %v48, %v47
  %v54 = vpack.c.b16 %v50, %v49
  %v57 = vunpack.c.l.b16 %v29
  %v58 = vunpack.c.l.b16 %v30
  %v59 = vpack.c.b16 %v58, %v57
  %vm61 = vcmask 130048
  %v63 = vsel %vm61, %v51, 0
  %v66 = vsel %vm61, %v52, 0
  %v69 = vsel %vm61, %v53, 0
  %v72 = vsel %vm61, %v54, 0
  %74 = vmatprep.subr.bf16.mxu0 0
  %75 = vmatpush1.bf16.msra.mxu0 %v59
  %76 = vmatprep.subr.bf16.mxu0 0
  %77 = vmatpush1.bf16.msra.mxu0 0
  %78 = vmatprep.subr.bf16.mxu0 0
  %79 = vmatpush1.bf16.msra.mxu0 0
  %80 = vmatprep.subr.bf16.mxu0 0
  %81 = vmatpush1.bf16.msra.mxu0 0
  %82 = vmatprep.subr.bf16.mxu0 0
  %83 = vmatpush1.bf16.msra.mxu0 0
  %84 = vmatprep.subr.bf16.mxu0 0
  %85 = vmatpush1.bf16.msra.mxu0 0
  %86 = vmatprep.subr.bf16.mxu0 0
  %87 = vmatpush1.bf16.msra.mxu0 0
  %88 = vmatprep.subr.bf16.mxu0 0
  %89 = vmatpush1.bf16.msra.mxu0 0
  %90 = vmatprep.subr.bf16.mxu0 0
  %91 = vmatpush1.bf16.msra.mxu0 0
  %92 = vmatprep.subr.bf16.mxu0 0
  %93 = vmatpush1.bf16.msra.mxu0 0
  %94 = vmatprep.subr.bf16.mxu0 0
  %95 = vmatpush1.bf16.msra.mxu0 0
  %96 = vmatprep.subr.bf16.mxu0 0
  %97 = vmatpush1.bf16.msra.mxu0 0
  %98 = vmatprep.subr.bf16.mxu0 0
  %99 = vmatpush1.bf16.msra.mxu0 0
  %100 = vmatprep.subr.bf16.mxu0 0
  %101 = vmatpush1.bf16.msra.mxu0 0
  %102 = vmatprep.subr.bf16.mxu0 0
  %103 = vmatpush1.bf16.msra.mxu0 0
  %104 = vmatprep.subr.bf16.mxu0 0
  %105 = vmatpush1.bf16.msra.mxu0 0
  %106 = vmatprep.mubr.bf16.mxu0 0
  %107 = vmatmul.mubr.bf16.gmra.mrb[0].mxu0 %v63
  %v108 = vpop.f32.mrb[0].mxu0
  %v109 = vadd.f32 %v34, %v108
  %v110 = vpop.f32.mrb[0].mxu0
  %v111 = vpop.f32.mrb[0].mxu0
  %v112 = vadd.f32 %v34, %v111
  %v113 = vpop.f32.mrb[0].mxu0
  %114 = vmatprep.mubr.bf16.mxu0 0
  %115 = vmatmul.mubr.bf16.gmra.mrb[0].mxu0 %v66
  %v116 = vpop.f32.mrb[0].mxu0
  %v117 = vadd.f32 %v34, %v116
  %v118 = vpop.f32.mrb[0].mxu0
  %v119 = vpop.f32.mrb[0].mxu0
  %v120 = vadd.f32 %v34, %v119
  %v121 = vpop.f32.mrb[0].mxu0
  %122 = vmatprep.mubr.bf16.mxu0 0
  %123 = vmatmul.mubr.bf16.gmra.mrb[0].mxu0 %v69
  %v124 = vpop.f32.mrb[0].mxu0
  %v125 = vadd.f32 %v34, %v124
  %v126 = vpop.f32.mrb[0].mxu0
  %v127 = vpop.f32.mrb[0].mxu0
  %v128 = vadd.f32 %v34, %v127
  %v129 = vpop.f32.mrb[0].mxu0
  %130 = vmatprep.mubr.bf16.mxu0 0
  %131 = vmatmul.mubr.bf16.gmra.mrb[0].mxu0 %v72
  %v132 = vpop.f32.mrb[0].mxu0
  %v133 = vadd.f32 %v34, %v132
  %v134 = vpop.f32.mrb[0].mxu0
  %v135 = vpop.f32.mrb[0].mxu0
  %v136 = vadd.f32 %v34, %v135
  %v137 = vpop.f32.mrb[0].mxu0
  %138 = vdwg.mxu0
  %139 = vst [vmem:[#allocation2] sm:$0xff] %v109
  %140 = vst [vmem:[#allocation2 + $0x8] sm:$0xff] %v112
  %141 = vst [vmem:[#allocation2 + $0x10] sm:$0xff] %v117
  %142 = vst [vmem:[#allocation2 + $0x18] sm:$0xff] %v120
  %143 = vst [vmem:[#allocation2 + $0x20] sm:$0xff] %v125
  %144 = vst [vmem:[#allocation2 + $0x28] sm:$0xff] %v128
  %145 = vst [vmem:[#allocation2 + $0x30] sm:$0xff] %v133
  %146 = vst [vmem:[#allocation2 + $0x38] sm:$0xff] %v136
  %v147 = vld [vmem:[%s2] sm:$0xf]
  %v148 = vld [vmem:[%s2 + $0x4] sm:$0xf]
  %v149 = vld [vmem:[%s2 + $0x8] sm:$0xf]
  %v150 = vld [vmem:[%s2 + $0xc] sm:$0xf]
  %v151 = vld [vmem:[#allocation2] sm:$0xff]
  %v156 = vunpack.c.l.b16 %v147
  %v157 = vunpack.c.l.b16 %v148
  %v158 = vunpack.c.l.b16 %v149
  %v159 = vunpack.c.l.b16 %v150
  %v160 = vpack.c.b16 %v157, %v156
  %v161 = vpack.c.b16 %v159, %v158
  %vm164 = vcmask 261120
  %v166 = vsel %vm164, 0, 0
  %168 = vmatprep.subr.bf16.mxu0 0
  %169 = vmatpush1.bf16.msra.mxu0 %v160
  %170 = vmatprep.subr.bf16.mxu0 0
  %171 = vmatpush1.bf16.msra.mxu0 %v161
  %172 = vmatprep.subr.bf16.mxu0 0
  %173 = vmatpush1.bf16.msra.mxu0 0
  %174 = vmatprep.subr.bf16.mxu0 0
  %175 = vmatpush1.bf16.msra.mxu0 0
  %176 = vmatprep.subr.bf16.mxu0 0
  %177 = vmatpush1.bf16.msra.mxu0 0
  %178 = vmatprep.subr.bf16.mxu0 0
  %179 = vmatpush1.bf16.msra.mxu0 0
  %180 = vmatprep.subr.bf16.mxu0 0
  %181 = vmatpush1.bf16.msra.mxu0 0
  %182 = vmatprep.subr.bf16.mxu0 0
  %183 = vmatpush1.bf16.msra.mxu0 0
  %184 = vmatprep.subr.bf16.mxu0 0
  %185 = vmatpush1.bf16.msra.mxu0 0
  %186 = vmatprep.subr.bf16.mxu0 0
  %187 = vmatpush1.bf16.msra.mxu0 0
  %188 = vmatprep.subr.bf16.mxu0 0
  %189 = vmatpush1.bf16.msra.mxu0 0
  %190 = vmatprep.subr.bf16.mxu0 0
  %191 = vmatpush1.bf16.msra.mxu0 0
  %192 = vmatprep.subr.bf16.mxu0 0
  %193 = vmatpush1.bf16.msra.mxu0 0
  %194 = vmatprep.subr.bf16.mxu0 0
  %195 = vmatpush1.bf16.msra.mxu0 0
  %196 = vmatprep.subr.bf16.mxu0 0
  %197 = vmatpush1.bf16.msra.mxu0 0
  %198 = vmatprep.subr.bf16.mxu0 0
  %199 = vmatpush1.bf16.msra.mxu0 0
  %200 = vmatprep.mubr.bf16.mxu0 0
  %201 = vmatmul.mubr.bf16.gmra.mrb[0].mxu0 %v166
  %v202 = vpop.f32.mrb[0].mxu0
  %v203 = vadd.f32 0.0, %v202
  %v204 = vpop.f32.mrb[0].mxu0
  %v205 = vpop.f32.mrb[0].mxu0
  %v206 = vpop.f32.mrb[0].mxu0
  %207 = vdwg.mxu0
  %v208 = vadd.f32 %v151, %v203
  %v209 = vxor.u32 %v208, 2147483648
  %v210 = vmul.f32 %v209, 1.442695
  %v211 = vpow.pop %v210
  %v212 = vadd.f32 %v211, 1.0
  %v213 = vrcp.pop %v212
  %v214 = vmul.f32 1.0, %v213
  %v215 = vtanh.pop %v208
  %v216 = vmul.f32 %v214, 0.0
  %218 = vrot.lane.b32.xlu0 %v215, 64
  %v219 = vpop.permute.xlu0 %218
  %v221 = vmul.f32 %v214, %v219
  %223 = vrot.lane.b32.xlu0 %v221, 32
  %v224 = vpop.permute.xlu0 %223
  %v226 = vadd.f32 %v216, %v224
  %v227 = vtanh.pop %v226
  %229 = vrot.lane.b32.xlu0 %v227, 64
  %v230 = vpop.permute.xlu0 %229
  %v232 = vmul.f32 %v214, %v230
  %s233 = scalar_lea.vmem [#allocation2], 8
  %v234 = vld [vmem:[%s233] sm:$0xff]
  %v235 = vpack.c.bf16 %v232, %v232
  %237 = vrot.lane.b32.xlu0 %v235, 32
  %v238 = vpop.permute.xlu0 %237
  %v240 = vsel %vm164, %v238, 0
  %242 = vmatprep.subr.bf16.mxu0 0
  %243 = vmatpush1.bf16.msra.mxu0 %v160
  %244 = vmatprep.subr.bf16.mxu0 0
  %245 = vmatpush1.bf16.msra.mxu0 %v161
  %246 = vmatprep.subr.bf16.mxu0 0
  %247 = vmatpush1.bf16.msra.mxu0 0
  %248 = vmatprep.subr.bf16.mxu0 0
  %249 = vmatpush1.bf16.msra.mxu0 0
  %250 = vmatprep.subr.bf16.mxu0 0
  %251 = vmatpush1.bf16.msra.mxu0 0
  %252 = vmatprep.subr.bf16.mxu0 0
  %253 = vmatpush1.bf16.msra.mxu0 0
  %254 = vmatprep.subr.bf16.mxu0 0
  %255 = vmatpush1.bf16.msra.mxu0 0
  %256 = vmatprep.subr.bf16.mxu0 0
  %257 = vmatpush1.bf16.msra.mxu0 0
  %258 = vmatprep.subr.bf16.mxu0 0
  %259 = vmatpush1.bf16.msra.mxu0 0
  %260 = vmatprep.subr.bf16.mxu0 0
  %261 = vmatpush1.bf16.msra.mxu0 0
  %262 = vmatprep.subr.bf16.mxu0 0
  %263 = vmatpush1.bf16.msra.mxu0 0
  %264 = vmatprep.subr.bf16.mxu0 0
  %265 = vmatpush1.bf16.msra.mxu0 0
  %266 = vmatprep.subr.bf16.mxu0 0
  %267 = vmatpush1.bf16.msra.mxu0 0
  %268 = vmatprep.subr.bf16.mxu0 0
  %269 = vmatpush1.bf16.msra.mxu0 0
  %270 = vmatprep.subr.bf16.mxu0 0
  %271 = vmatpush1.bf16.msra.mxu0 0
  %272 = vmatprep.subr.bf16.mxu0 0
  %273 = vmatpush1.bf16.msra.mxu0 0
  %274 = vmatprep.mubr.bf16.mxu0 0
  %275 = vmatmul.mubr.bf16.gmra.mrb[0].mxu0 %v240
  %v276 = vpop.f32.mrb[0].mxu0
  %v277 = vadd.f32 0.0, %v276
  %v278 = vpop.f32.mrb[0].mxu0
  %v279 = vpop.f32.mrb[0].mxu0
  %v280 = vpop.f32.mrb[0].mxu0
  %281 = vdwg.mxu0
  %v282 = vadd.f32 %v234, %v277
  %v283 = vxor.u32 %v282, 2147483648
  %v284 = vmul.f32 %v283, 1.442695
  %v285 = vpow.pop %v284
  %v286 = vadd.f32 %v285, 1.0
  %v287 = vrcp.pop %v286
  %v288 = vmul.f32 1.0, %v287
  %v289 = vtanh.pop %v282
  %v290 = vmul.f32 %v288, %v226
  %292 = vrot.lane.b32.xlu0 %v289, 64
  %v293 = vpop.permute.xlu0 %292
  %v295 = vmul.f32 %v288, %v293
  %297 = vrot.lane.b32.xlu0 %v295, 32
  %v298 = vpop.permute.xlu0 %297
  %v300 = vadd.f32 %v290, %v298
  %v301 = vtanh.pop %v300
  %303 = vrot.lane.b32.xlu0 %v301, 64
  %v304 = vpop.permute.xlu0 %303
  %v306 = vmul.f32 %v288, %v304
  %s307 = scalar_lea.vmem [#allocation2], 16
  %v308 = vld [vmem:[%s307] sm:$0xff]
  %v309 = vpack.c.bf16 %v306, %v306
  %311 = vrot.lane.b32.xlu0 %v309, 32
  %v312 = vpop.permute.xlu0 %311
  %v314 = vsel %vm164, %v312, 0
  %316 = vmatprep.subr.bf16.mxu0 0
  %317 = vmatpush1.bf16.msra.mxu0 %v160
  %318 = vmatprep.subr.bf16.mxu0 0
  %319 = vmatpush1.bf16.msra.mxu0 %v161
  %320 = vmatprep.subr.bf16.mxu0 0
  %321 = vmatpush1.bf16.msra.mxu0 0
  %322 = vmatprep.subr.bf16.mxu0 0
  %323 = vmatpush1.bf16.msra.mxu0 0
  %324 = vmatprep.subr.bf16.mxu0 0
  %325 = vmatpush1.bf16.msra.mxu0 0
  %326 = vmatprep.subr.bf16.mxu0 0
  %327 = vmatpush1.bf16.msra.mxu0 0
  %328 = vmatprep.subr.bf16.mxu0 0
  %329 = vmatpush1.bf16.msra.mxu0 0
  %330 = vmatprep.subr.bf16.mxu0 0
  %331 = vmatpush1.bf16.msra.mxu0 0
  %332 = vmatprep.subr.bf16.mxu0 0
  %333 = vmatpush1.bf16.msra.mxu0 0
  %334 = vmatprep.subr.bf16.mxu0 0
  %335 = vmatpush1.bf16.msra.mxu0 0
  %336 = vmatprep.subr.bf16.mxu0 0
  %337 = vmatpush1.bf16.msra.mxu0 0
  %338 = vmatprep.subr.bf16.mxu0 0
  %339 = vmatpush1.bf16.msra.mxu0 0
  %340 = vmatprep.subr.bf16.mxu0 0
  %341 = vmatpush1.bf16.msra.mxu0 0
  %342 = vmatprep.subr.bf16.mxu0 0
  %343 = vmatpush1.bf16.msra.mxu0 0
  %344 = vmatprep.subr.bf16.mxu0 0
  %345 = vmatpush1.bf16.msra.mxu0 0
  %346 = vmatprep.subr.bf16.mxu0 0
  %347 = vmatpush1.bf16.msra.mxu0 0
  %348 = vmatprep.mubr.bf16.mxu0 0
  %349 = vmatmul.mubr.bf16.gmra.mrb[0].mxu0 %v314
  %v350 = vpop.f32.mrb[0].mxu0
  %v351 = vadd.f32 0.0, %v350
  %v352 = vpop.f32.mrb[0].mxu0
  %v353 = vpop.f32.mrb[0].mxu0
  %v354 = vpop.f32.mrb[0].mxu0
  %355 = vdwg.mxu0
  %v356 = vadd.f32 %v308, %v351
  %v357 = vxor.u32 %v356, 2147483648
  %v358 = vmul.f32 %v357, 1.442695
  %v359 = vpow.pop %v358
  %v360 = vadd.f32 %v359, 1.0
  %v361 = vrcp.pop %v360
  %v362 = vmul.f32 1.0, %v361
  %v363 = vtanh.pop %v356
  %v364 = vmul.f32 %v362, %v300
  %366 = vrot.lane.b32.xlu0 %v363, 64
  %v367 = vpop.permute.xlu0 %366
  %v369 = vmul.f32 %v362, %v367
  %371 = vrot.lane.b32.xlu0 %v369, 32
  %v372 = vpop.permute.xlu0 %371
  %v374 = vadd.f32 %v364, %v372
  %v375 = vtanh.pop %v374
  %377 = vrot.lane.b32.xlu0 %v375, 64
  %v378 = vpop.permute.xlu0 %377
  %v380 = vmul.f32 %v362, %v378
  %s381 = scalar_lea.vmem [#allocation2], 24
  %v382 = vld [vmem:[%s381] sm:$0xff]
  %v383 = vpack.c.bf16 %v380, %v380
  %385 = vrot.lane.b32.xlu0 %v383, 32
  %v386 = vpop.permute.xlu0 %385
  %v388 = vsel %vm164, %v386, 0
  %390 = vmatprep.subr.bf16.mxu0 0
  %391 = vmatpush1.bf16.msra.mxu0 %v160
  %392 = vmatprep.subr.bf16.mxu0 0
  %393 = vmatpush1.bf16.msra.mxu0 %v161
  %394 = vmatprep.subr.bf16.mxu0 0
  %395 = vmatpush1.bf16.msra.mxu0 0
  %396 = vmatprep.subr.bf16.mxu0 0
  %397 = vmatpush1.bf16.msra.mxu0 0
  %398 = vmatprep.subr.bf16.mxu0 0
  %399 = vmatpush1.bf16.msra.mxu0 0
  %400 = vmatprep.subr.bf16.mxu0 0
  %401 = vmatpush1.bf16.msra.mxu0 0
  %402 = vmatprep.subr.bf16.mxu0 0
  %403 = vmatpush1.bf16.msra.mxu0 0
  %404 = vmatprep.subr.bf16.mxu0 0
  %405 = vmatpush1.bf16.msra.mxu0 0
  %406 = vmatprep.subr.bf16.mxu0 0
  %407 = vmatpush1.bf16.msra.mxu0 0
  %408 = vmatprep.subr.bf16.mxu0 0
  %409 = vmatpush1.bf16.msra.mxu0 0
  %410 = vmatprep.subr.bf16.mxu0 0
  %411 = vmatpush1.bf16.msra.mxu0 0
  %412 = vmatprep.subr.bf16.mxu0 0
  %413 = vmatpush1.bf16.msra.mxu0 0
  %414 = vmatprep.subr.bf16.mxu0 0
  %415 = vmatpush1.bf16.msra.mxu0 0
  %416 = vmatprep.subr.bf16.mxu0 0
  %417 = vmatpush1.bf16.msra.mxu0 0
  %418 = vmatprep.subr.bf16.mxu0 0
  %419 = vmatpush1.bf16.msra.mxu0 0
  %420 = vmatprep.subr.bf16.mxu0 0
  %421 = vmatpush1.bf16.msra.mxu0 0
  %422 = vmatprep.mubr.bf16.mxu0 0
  %423 = vmatmul.mubr.bf16.gmra.mrb[0].mxu0 %v388
  %v424 = vpop.f32.mrb[0].mxu0
  %v425 = vadd.f32 0.0, %v424
  %v426 = vpop.f32.mrb[0].mxu0
  %v427 = vpop.f32.mrb[0].mxu0
  %v428 = vpop.f32.mrb[0].mxu0
  %429 = vdwg.mxu0
  %v430 = vadd.f32 %v382, %v425
  %v431 = vxor.u32 %v430, 2147483648
  %v432 = vmul.f32 %v431, 1.442695
  %v433 = vpow.pop %v432
  %v434 = vadd.f32 %v433, 1.0
  %v435 = vrcp.pop %v434
  %v436 = vmul.f32 1.0, %v435
  %v437 = vtanh.pop %v430
  %v438 = vmul.f32 %v436, %v374
  %440 = vrot.lane.b32.xlu0 %v437, 64
  %v441 = vpop.permute.xlu0 %440
  %v443 = vmul.f32 %v436, %v441
  %445 = vrot.lane.b32.xlu0 %v443, 32
  %v446 = vpop.permute.xlu0 %445
  %v448 = vadd.f32 %v438, %v446
  %v449 = vtanh.pop %v448
  %451 = vrot.lane.b32.xlu0 %v449, 64
  %v452 = vpop.permute.xlu0 %451
  %v454 = vmul.f32 %v436, %v452
  %s455 = scalar_lea.vmem [#allocation2], 32
  %v456 = vld [vmem:[%s455] sm:$0xff]
  %v457 = vpack.c.bf16 %v454, %v454
  %459 = vrot.lane.b32.xlu0 %v457, 32
  %v460 = vpop.permute.xlu0 %459
  %v462 = vsel %vm164, %v460, 0
  %464 = vmatprep.subr.bf16.mxu0 0
  %465 = vmatpush1.bf16.msra.mxu0 %v160
  %466 = vmatprep.subr.bf16.mxu0 0
  %467 = vmatpush1.bf16.msra.mxu0 %v161
  %468 = vmatprep.subr.bf16.mxu0 0
  %469 = vmatpush1.bf16.msra.mxu0 0
  %470 = vmatprep.subr.bf16.mxu0 0
  %471 = vmatpush1.bf16.msra.mxu0 0
  %472 = vmatprep.subr.bf16.mxu0 0
  %473 = vmatpush1.bf16.msra.mxu0 0
  %474 = vmatprep.subr.bf16.mxu0 0
  %475 = vmatpush1.bf16.msra.mxu0 0
  %476 = vmatprep.subr.bf16.mxu0 0
  %477 = vmatpush1.bf16.msra.mxu0 0
  %478 = vmatprep.subr.bf16.mxu0 0
  %479 = vmatpush1.bf16.msra.mxu0 0
  %480 = vmatprep.subr.bf16.mxu0 0
  %481 = vmatpush1.bf16.msra.mxu0 0
  %482 = vmatprep.subr.bf16.mxu0 0
  %483 = vmatpush1.bf16.msra.mxu0 0
  %484 = vmatprep.subr.bf16.mxu0 0
  %485 = vmatpush1.bf16.msra.mxu0 0
  %486 = vmatprep.subr.bf16.mxu0 0
  %487 = vmatpush1.bf16.msra.mxu0 0
  %488 = vmatprep.subr.bf16.mxu0 0
  %489 = vmatpush1.bf16.msra.mxu0 0
  %490 = vmatprep.subr.bf16.mxu0 0
  %491 = vmatpush1.bf16.msra.mxu0 0
  %492 = vmatprep.subr.bf16.mxu0 0
  %493 = vmatpush1.bf16.msra.mxu0 0
  %494 = vmatprep.subr.bf16.mxu0 0
  %495 = vmatpush1.bf16.msra.mxu0 0
  %496 = vmatprep.mubr.bf16.mxu0 0
  %497 = vmatmul.mubr.bf16.gmra.mrb[0].mxu0 %v462
  %v498 = vpop.f32.mrb[0].mxu0
  %v499 = vadd.f32 0.0, %v498
  %v500 = vpop.f32.mrb[0].mxu0
  %v501 = vpop.f32.mrb[0].mxu0
  %v502 = vpop.f32.mrb[0].mxu0
  %503 = vdwg.mxu0
  %v504 = vadd.f32 %v456, %v499
  %v505 = vxor.u32 %v504, 2147483648
  %v506 = vmul.f32 %v505, 1.442695
  %v507 = vpow.pop %v506
  %v508 = vadd.f32 %v507, 1.0
  %v509 = vrcp.pop %v508
  %v510 = vmul.f32 1.0, %v509
  %v511 = vtanh.pop %v504
  %v512 = vmul.f32 %v510, %v448
  %514 = vrot.lane.b32.xlu0 %v511, 64
  %v515 = vpop.permute.xlu0 %514
  %v517 = vmul.f32 %v510, %v515
  %519 = vrot.lane.b32.xlu0 %v517, 32
  %v520 = vpop.permute.xlu0 %519
  %v522 = vadd.f32 %v512, %v520
  %v523 = vtanh.pop %v522
  %525 = vrot.lane.b32.xlu0 %v523, 64
  %v526 = vpop.permute.xlu0 %525
  %v528 = vmul.f32 %v510, %v526
  %s529 = scalar_lea.vmem [#allocation2], 40
  %v530 = vld [vmem:[%s529] sm:$0xff]
  %v531 = vpack.c.bf16 %v528, %v528
  %533 = vrot.lane.b32.xlu0 %v531, 32
  %v534 = vpop.permute.xlu0 %533
  %v536 = vsel %vm164, %v534, 0
  %538 = vmatprep.subr.bf16.mxu0 0
  %539 = vmatpush1.bf16.msra.mxu0 %v160
  %540 = vmatprep.subr.bf16.mxu0 0
  %541 = vmatpush1.bf16.msra.mxu0 %v161
  %542 = vmatprep.subr.bf16.mxu0 0
  %543 = vmatpush1.bf16.msra.mxu0 0
  %544 = vmatprep.subr.bf16.mxu0 0
  %545 = vmatpush1.bf16.msra.mxu0 0
  %546 = vmatprep.subr.bf16.mxu0 0
  %547 = vmatpush1.bf16.msra.mxu0 0
  %548 = vmatprep.subr.bf16.mxu0 0
  %549 = vmatpush1.bf16.msra.mxu0 0
  %550 = vmatprep.subr.bf16.mxu0 0
  %551 = vmatpush1.bf16.msra.mxu0 0
  %552 = vmatprep.subr.bf16.mxu0 0
  %553 = vmatpush1.bf16.msra.mxu0 0
  %554 = vmatprep.subr.bf16.mxu0 0
  %555 = vmatpush1.bf16.msra.mxu0 0
  %556 = vmatprep.subr.bf16.mxu0 0
  %557 = vmatpush1.bf16.msra.mxu0 0
  %558 = vmatprep.subr.bf16.mxu0 0
  %559 = vmatpush1.bf16.msra.mxu0 0
  %560 = vmatprep.subr.bf16.mxu0 0
  %561 = vmatpush1.bf16.msra.mxu0 0
  %562 = vmatprep.subr.bf16.mxu0 0
  %563 = vmatpush1.bf16.msra.mxu0 0
  %564 = vmatprep.subr.bf16.mxu0 0
  %565 = vmatpush1.bf16.msra.mxu0 0
  %566 = vmatprep.subr.bf16.mxu0 0
  %567 = vmatpush1.bf16.msra.mxu0 0
  %568 = vmatprep.subr.bf16.mxu0 0
  %569 = vmatpush1.bf16.msra.mxu0 0
  %570 = vmatprep.mubr.bf16.mxu0 0
  %571 = vmatmul.mubr.bf16.gmra.mrb[0].mxu0 %v536
  %v572 = vpop.f32.mrb[0].mxu0
  %v573 = vadd.f32 0.0, %v572
  %v574 = vpop.f32.mrb[0].mxu0
  %v575 = vpop.f32.mrb[0].mxu0
  %v576 = vpop.f32.mrb[0].mxu0
  %577 = vdwg.mxu0
  %v578 = vadd.f32 %v530, %v573
  %v579 = vxor.u32 %v578, 2147483648
  %v580 = vmul.f32 %v579, 1.442695
  %v581 = vpow.pop %v580
  %v582 = vadd.f32 %v581, 1.0
  %v583 = vrcp.pop %v582
  %v584 = vmul.f32 1.0, %v583
  %v585 = vtanh.pop %v578
  %v586 = vmul.f32 %v584, %v522
  %588 = vrot.lane.b32.xlu0 %v585, 64
  %v589 = vpop.permute.xlu0 %588
  %v591 = vmul.f32 %v584, %v589
  %593 = vrot.lane.b32.xlu0 %v591, 32
  %v594 = vpop.permute.xlu0 %593
  %v596 = vadd.f32 %v586, %v594
  %v597 = vtanh.pop %v596
  %599 = vrot.lane.b32.xlu0 %v597, 64
  %v600 = vpop.permute.xlu0 %599
  %v602 = vmul.f32 %v584, %v600
  %s603 = scalar_lea.vmem [#allocation2], 48
  %v604 = vld [vmem:[%s603] sm:$0xff]
  %v605 = vpack.c.bf16 %v602, %v602
  %607 = vrot.lane.b32.xlu0 %v605, 32
  %v608 = vpop.permute.xlu0 %607
  %v610 = vsel %vm164, %v608, 0
  %612 = vmatprep.subr.bf16.mxu0 0
  %613 = vmatpush1.bf16.msra.mxu0 %v160
  %614 = vmatprep.subr.bf16.mxu0 0
  %615 = vmatpush1.bf16.msra.mxu0 %v161
  %616 = vmatprep.subr.bf16.mxu0 0
  %617 = vmatpush1.bf16.msra.mxu0 0
  %618 = vmatprep.subr.bf16.mxu0 0
  %619 = vmatpush1.bf16.msra.mxu0 0
  %620 = vmatprep.subr.bf16.mxu0 0
  %621 = vmatpush1.bf16.msra.mxu0 0
  %622 = vmatprep.subr.bf16.mxu0 0
  %623 = vmatpush1.bf16.msra.mxu0 0
  %624 = vmatprep.subr.bf16.mxu0 0
  %625 = vmatpush1.bf16.msra.mxu0 0
  %626 = vmatprep.subr.bf16.mxu0 0
  %627 = vmatpush1.bf16.msra.mxu0 0
  %628 = vmatprep.subr.bf16.mxu0 0
  %629 = vmatpush1.bf16.msra.mxu0 0
  %630 = vmatprep.subr.bf16.mxu0 0
  %631 = vmatpush1.bf16.msra.mxu0 0
  %632 = vmatprep.subr.bf16.mxu0 0
  %633 = vmatpush1.bf16.msra.mxu0 0
  %634 = vmatprep.subr.bf16.mxu0 0
  %635 = vmatpush1.bf16.msra.mxu0 0
  %636 = vmatprep.subr.bf16.mxu0 0
  %637 = vmatpush1.bf16.msra.mxu0 0
  %638 = vmatprep.subr.bf16.mxu0 0
  %639 = vmatpush1.bf16.msra.mxu0 0
  %640 = vmatprep.subr.bf16.mxu0 0
  %641 = vmatpush1.bf16.msra.mxu0 0
  %642 = vmatprep.subr.bf16.mxu0 0
  %643 = vmatpush1.bf16.msra.mxu0 0
  %644 = vmatprep.mubr.bf16.mxu0 0
  %645 = vmatmul.mubr.bf16.gmra.mrb[0].mxu0 %v610
  %v646 = vpop.f32.mrb[0].mxu0
  %v647 = vadd.f32 0.0, %v646
  %v648 = vpop.f32.mrb[0].mxu0
  %v649 = vpop.f32.mrb[0].mxu0
  %v650 = vpop.f32.mrb[0].mxu0
  %651 = vdwg.mxu0
  %v652 = vadd.f32 %v604, %v647
  %v653 = vxor.u32 %v652, 2147483648
  %v654 = vmul.f32 %v653, 1.442695
  %v655 = vpow.pop %v654
  %v656 = vadd.f32 %v655, 1.0
  %v657 = vrcp.pop %v656
  %v658 = vmul.f32 1.0, %v657
  %v659 = vtanh.pop %v652
  %v660 = vmul.f32 %v658, %v596
  %662 = vrot.lane.b32.xlu0 %v659, 64
  %v663 = vpop.permute.xlu0 %662
  %v665 = vmul.f32 %v658, %v663
  %667 = vrot.lane.b32.xlu0 %v665, 32
  %v668 = vpop.permute.xlu0 %667
  %v670 = vadd.f32 %v660, %v668
  %v671 = vtanh.pop %v670
  %673 = vrot.lane.b32.xlu0 %v671, 64
  %v674 = vpop.permute.xlu0 %673
  %v676 = vmul.f32 %v658, %v674
  %s677 = scalar_lea.vmem [#allocation2], 56
  %v678 = vld [vmem:[%s677] sm:$0xff]
  %v679 = vpack.c.bf16 %v676, %v676
  %681 = vrot.lane.b32.xlu0 %v679, 32
  %v682 = vpop.permute.xlu0 %681
  %v684 = vsel %vm164, %v682, 0
  %686 = vmatprep.subr.bf16.mxu0 0
  %687 = vmatpush1.bf16.msra.mxu0 %v160
  %688 = vmatprep.subr.bf16.mxu0 0
  %689 = vmatpush1.bf16.msra.mxu0 %v161
  %690 = vmatprep.subr.bf16.mxu0 0
  %691 = vmatpush1.bf16.msra.mxu0 0
  %692 = vmatprep.subr.bf16.mxu0 0
  %693 = vmatpush1.bf16.msra.mxu0 0
  %694 = vmatprep.subr.bf16.mxu0 0
  %695 = vmatpush1.bf16.msra.mxu0 0
  %696 = vmatprep.subr.bf16.mxu0 0
  %697 = vmatpush1.bf16.msra.mxu0 0
  %698 = vmatprep.subr.bf16.mxu0 0
  %699 = vmatpush1.bf16.msra.mxu0 0
  %700 = vmatprep.subr.bf16.mxu0 0
  %701 = vmatpush1.bf16.msra.mxu0 0
  %702 = vmatprep.subr.bf16.mxu0 0
  %703 = vmatpush1.bf16.msra.mxu0 0
  %704 = vmatprep.subr.bf16.mxu0 0
  %705 = vmatpush1.bf16.msra.mxu0 0
  %706 = vmatprep.subr.bf16.mxu0 0
  %707 = vmatpush1.bf16.msra.mxu0 0
  %708 = vmatprep.subr.bf16.mxu0 0
  %709 = vmatpush1.bf16.msra.mxu0 0
  %710 = vmatprep.subr.bf16.mxu0 0
  %711 = vmatpush1.bf16.msra.mxu0 0
  %712 = vmatprep.subr.bf16.mxu0 0
  %713 = vmatpush1.bf16.msra.mxu0 0
  %714 = vmatprep.subr.bf16.mxu0 0
  %715 = vmatpush1.bf16.msra.mxu0 0
  %716 = vmatprep.subr.bf16.mxu0 0
  %717 = vmatpush1.bf16.msra.mxu0 0
  %718 = vmatprep.mubr.bf16.mxu0 0
  %719 = vmatmul.mubr.bf16.gmra.mrb[0].mxu0 %v684
  %v720 = vpop.f32.mrb[0].mxu0
  %v721 = vadd.f32 0.0, %v720
  %v722 = vpop.f32.mrb[0].mxu0
  %v723 = vpop.f32.mrb[0].mxu0
  %v724 = vpop.f32.mrb[0].mxu0
  %725 = vdwg.mxu0
  %v726 = vadd.f32 %v678, %v721
  %v727 = vxor.u32 %v726, 2147483648
  %v728 = vmul.f32 %v727, 1.442695
  %v729 = vpow.pop %v728
  %v730 = vadd.f32 %v729, 1.0
  %v731 = vrcp.pop %v730
  %v732 = vmul.f32 1.0, %v731
  %v733 = vtanh.pop %v726
  %v734 = vmul.f32 %v732, %v670
  %736 = vrot.lane.b32.xlu0 %v733, 64
  %v737 = vpop.permute.xlu0 %736
  %v739 = vmul.f32 %v732, %v737
  %741 = vrot.lane.b32.xlu0 %v739, 32
  %v742 = vpop.permute.xlu0 %741
  %v744 = vadd.f32 %v734, %v742
  %v745 = vtanh.pop %v744
  %747 = vrot.lane.b32.xlu0 %v745, 64
  %v748 = vpop.permute.xlu0 %747
  %v750 = vmul.f32 %v732, %v748
  %v751 = vlaneseq
  %v752 = vshrl.u32 %v751, 7
  %v753 = vsub.s32 0, %v752
  %v754 = vrot.slane %v19, %v753
  %756 = vrot.lane.b32.xlu0 %v754, 96
  %v757 = vpop.permute.xlu0 %756
  %v759 = vmul.f32 %v750, %v757
  %761 = vrot.lane.b32.xlu0 %v759, 32
  %v762 = vpop.permute.xlu0 %761
  %vm764 = vcmask 257024
  %v765 = vsel %vm764, %v762, 0.0
  %766 = vadd.xlane.f32.xlu0 %v765
  %v767 = vpop.xlane.xlu0 %766
  %v768 = vlaneseq
  %v769 = vshrl.u32 %v768, 7
  %v770 = vsub.s32 0, %v769
  %v771 = vrot.slane %v20, %v770
  %v772 = vadd.f32 %v767, %v771
  %vm773 = vcmask 3072
  %774 = vst.msk [vmem:[%s4] sm:$0xf] %vm773, %v772
  // Predicated region
  $region18: #{tpu_custom_call.1} parent=0 // pred_check
    _
  $region19: #{tpu_custom_call.1} parent=0 // pred_check_branch
    %776 = sbr.rel (0) target = $region21
  $region20: #{tpu_custom_call.1} parent=0 // pred_region
    _
  $region21: #{tpu_custom_call.1} parent=0 // pred_fallthru
    _
  // Predicated region
  $region22: #{tpu_custom_call.1} parent=0 // pred_check
    _
  $region23: #{tpu_custom_call.1} parent=0 // pred_check_branch
    %778 = sbr.rel (0) target = $region25
  $region24: #{tpu_custom_call.1} parent=0 // pred_region
    _
  $region25: #{tpu_custom_call.1} parent=0 // pred_fallthru
    _

</llo_original>
